<compile_context>
chip_gen: v7x
topology: tpu7x:2x2x1
jax: 0.10.0
libtpu: 0.0.40
codegen_flags: <defaults>
</compile_context>

<pallas_src>
import functools

import jax
import jax.numpy as jnp
from jax.experimental import pallas as pl
from jax.experimental.pallas import tpu as pltpu


_GELU_C = 0.7978845608028654  # sqrt(2 / pi)


def _mlp_kernel(x_ref, w_fc_ref, b_fc_ref, w_proj_ref, b_proj_ref, o_ref, acc_ref):
    k = pl.program_id(1)

    @pl.when(k == 0)
    def _init():
        acc_ref[...] = jnp.zeros_like(acc_ref)

    # c_fc slab: (tm, nx) @ (nx, tn) -> (tm, tn), native-dtype MXU inputs, f32 accumulate.
    h = jnp.dot(x_ref[...], w_fc_ref[...], preferred_element_type=jnp.float32)
    h = h + b_fc_ref[...].astype(jnp.float32)

    # gelu (tanh approximation, same constants as the torch.jit.script'ed gelu), in f32.
    h_sq = h * h
    h = 0.5 * h * (1.0 + jnp.tanh(_GELU_C * h * (1.0 + 0.044715 * h_sq)))

    # c_proj partial product: (tm, tn) @ (tn, nx) accumulated into the f32 scratch.
    acc_ref[...] += jnp.dot(h.astype(w_proj_ref.dtype), w_proj_ref[...],
                            preferred_element_type=jnp.float32)

    @pl.when(k == pl.num_programs(1) - 1)
    def _finalize():
        out = acc_ref[...] + b_proj_ref[...].astype(jnp.float32)
        o_ref[...] = out.astype(o_ref.dtype)
        # TODO(synk): training-mode dropout (stochastic mask via pltpu.prng_random_bits)
        # not implemented; module semantics here are inference (identity dropout).


def _pick_tn(n_state, requested, align=128):
    """Largest multiple of `align` <= requested that evenly divides n_state
    (falls back to the full dim). Keeps the k-reduction exact (no padded garbage
    entering the accumulator) and lane-dense slabs."""
    if n_state <= requested:
        return n_state
    t = (requested // align) * align
    while t >= align:
        if n_state % t == 0:
            return t
        t -= align
    return n_state


@functools.partial(jax.jit, static_argnames=("tm", "tn"))
def mlp_forward(x, w_fc, b_fc, w_proj, b_proj, *, tm=256, tn=512):
    """x: [B, S, nx] -> [B, S, nx]."""
    B, S, nx = x.shape
    n_state = w_fc.shape[1]
    M = B * S
    x2d = x.reshape(M, nx)

    # Clamp tiles to the problem; keep the row tile sublane-aligned (multiple of 8).
    tm_eff = min(tm, M)
    if tm_eff < M:
        tm_eff = max(8, (tm_eff // 8) * 8)
    tn_eff = _pick_tn(n_state, tn)

    # Biases kept 2D so they map cleanly onto (sublane, lane) layout.
    b_fc2d = b_fc.reshape(1, n_state)
    b_proj2d = b_proj.reshape(1, nx)

    grid = (pl.cdiv(M, tm_eff), n_state // tn_eff)

    itemsize = jnp.dtype(x.dtype).itemsize
    cost = pl.CostEstimate(
        flops=4 * M * nx * n_state,          # two matmuls
        transcendentals=M * n_state,         # one tanh per hidden element
        bytes_accessed=(x2d.size + w_fc.size + w_proj.size
                        + b_fc.size + b_proj.size + M * nx) * itemsize,
    )

    # Rough VMEM budget: double-buffered x / weight slabs / output + f32 accumulator.
    vmem_est = (2 * tm_eff * nx + 2 * nx * tn_eff + 2 * tn_eff * nx
                + 2 * tm_eff * nx) * itemsize + tm_eff * nx * 4
    vmem_limit = int(min(max(32 * 1024 * 1024, 2 * vmem_est), 64 * 1024 * 1024))

    out = pl.pallas_call(
        _mlp_kernel,
        out_shape=jax.ShapeDtypeStruct((M, nx), x.dtype),
        grid_spec=pltpu.PrefetchScalarGridSpec(
            num_scalar_prefetch=0,
            grid=grid,
            in_specs=[
                pl.BlockSpec((tm_eff, nx), lambda i, k: (i, 0)),    # x rows (resident over k)
                pl.BlockSpec((nx, tn_eff), lambda i, k: (0, k)),    # w_fc column slab
                pl.BlockSpec((1, tn_eff), lambda i, k: (0, k)),     # b_fc slab
                pl.BlockSpec((tn_eff, nx), lambda i, k: (k, 0)),    # w_proj row slab
                pl.BlockSpec((1, nx), lambda i, k: (0, 0)),         # b_proj
            ],
            out_specs=pl.BlockSpec((tm_eff, nx), lambda i, k: (i, 0)),
            scratch_shapes=[pltpu.VMEM((tm_eff, nx), jnp.float32)],
        ),
        compiler_params=pltpu.CompilerParams(
            dimension_semantics=("parallel", "arbitrary"),
            vmem_limit_bytes=vmem_limit,
        ),
        cost_estimate=cost,
    )(x2d, w_fc, b_fc2d, w_proj, b_proj2d)

    return out.reshape(B, S, nx)


def _reference(x, w_fc, b_fc, w_proj, b_proj):
    x32 = x.astype(jnp.float32)
    h = x32 @ w_fc.astype(jnp.float32) + b_fc.astype(jnp.float32)
    h = 0.5 * h * (1.0 + jnp.tanh(_GELU_C * (h + 0.044715 * h ** 3)))
    h2 = h @ w_proj.astype(jnp.float32) + b_proj.astype(jnp.float32)
    return h2.astype(x.dtype)


if __name__ == "__main__":
    # Small shapes consistent with the module: n_embd = 128, n_state = 4 * n_embd = 512.
    B, S, nx = 2, 64, 128
    n_state = 4 * nx

    key = jax.random.PRNGKey(0)
    kx, kw1, kw2, kb1, kb2 = jax.random.split(key, 5)

    x = jax.random.normal(kx, (B, S, nx), dtype=jnp.float32)
    # Conv1D-style weights (normal, std=0.02); small nonzero biases to exercise the bias path.
    w_fc = 0.02 * jax.random.normal(kw1, (nx, n_state), dtype=jnp.float32)
    b_fc = 0.01 * jax.random.normal(kb1, (n_state,), dtype=jnp.float32)
    w_proj = 0.02 * jax.random.normal(kw2, (n_state, nx), dtype=jnp.float32)
    b_proj = 0.01 * jax.random.normal(kb2, (nx,), dtype=jnp.float32)

    # Small tiles so the test exercises both the row grid and the k-reduction/accumulator path.
    out = mlp_forward(x, w_fc, b_fc, w_proj, b_proj, tm=64, tn=128)
    out = jax.block_until_ready(out)

    ref = _reference(x, w_fc, b_fc, w_proj, b_proj)
    assert out.shape == (B, S, nx)
    assert jnp.allclose(out, ref, atol=1e-5, rtol=1e-5), "mismatch vs reference"

    print("KERNEL_OK")
</pallas_src>

<mosaic_0001>
module attributes {stable_mosaic.version = 11 : i64} {
  func.func @_mlp_kernel(%arg0: i32, %arg1: i32, %arg2: memref<64x128xf32, #tpu.memory_space<vmem>>, %arg3: memref<128x128xf32, #tpu.memory_space<vmem>>, %arg4: memref<1x128xf32, #tpu.memory_space<vmem>>, %arg5: memref<128x128xf32, #tpu.memory_space<vmem>>, %arg6: memref<1x128xf32, #tpu.memory_space<vmem>>, %arg7: memref<64x128xf32, #tpu.memory_space<vmem>>, %arg8: memref<64x128xf32, #tpu.memory_space<vmem>>) attributes {dimension_semantics = [#tpu.dimension_semantics<parallel>, #tpu.dimension_semantics<arbitrary>], iteration_bounds = array<i64: 2, 4>, scalar_prefetch = 0 : i64, scratch_operands = 1 : i64, tpu.core_type = #tpu.core_type<tc>, window_params = [{transform_indices = @transform_0, window_bounds = array<i64: 64, 128>}, {transform_indices = @transform_1, window_bounds = array<i64: 128, 128>}, {transform_indices = @transform_2, window_bounds = array<i64: 1, 128>}, {transform_indices = @transform_3, window_bounds = array<i64: 128, 128>}, {pipeline_mode = #tpu.pipeline_mode<synchronous>, transform_indices = @transform_4, window_bounds = array<i64: 1, 128>}, {transform_indices = @transform_5, window_bounds = array<i64: 64, 128>}]} {
    %c0_i32 = arith.constant 0 : i32
    %0 = arith.cmpi eq, %arg1, %c0_i32 : i32
    %1 = arith.extui %0 : i1 to i32
    %c0_i32_0 = arith.constant 0 : i32
    %2 = arith.cmpi ne, %1, %c0_i32_0 : i32
    scf.if %2 {
      %cst_19 = arith.constant 0.000000e+00 : f32
      %31 = vector.broadcast %cst_19 : f32 to vector<64x128xf32>
      %c0_20 = arith.constant 0 : index
      %c0_21 = arith.constant 0 : index
      %32 = vector.load %arg8[%c0_20, %c0_21] : memref<64x128xf32, #tpu.memory_space<vmem>>, vector<64x128xf32>
      tpu.vector_store %arg8[%c0_20, %c0_21], %31 {strides = array<i32>} : memref<64x128xf32, #tpu.memory_space<vmem>>, vector<64x128xf32>,
    } else {
    }
    %c0 = arith.constant 0 : index
    %c0_1 = arith.constant 0 : index
    %3 = vector.load %arg2[%c0, %c0_1] : memref<64x128xf32, #tpu.memory_space<vmem>>, vector<64x128xf32>
    %c0_2 = arith.constant 0 : index
    %c0_3 = arith.constant 0 : index
    %4 = vector.load %arg3[%c0_2, %c0_3] : memref<128x128xf32, #tpu.memory_space<vmem>>, vector<128x128xf32>
    %cst = arith.constant dense<0.000000e+00> : vector<64x128xf32>
    %5 = tpu.matmul %3, %4, %cst {dimension_numbers = #tpu.dot_dimension_numbers<[1], [0], [0], [1], [0, 0, 1, 1], [], []>} : vector<64x128xf32>, vector<128x128xf32>, vector<64x128xf32> -> vector<64x128xf32>
    %c0_4 = arith.constant 0 : index
    %c0_5 = arith.constant 0 : index
    %6 = vector.load %arg4[%c0_4, %c0_5] : memref<1x128xf32, #tpu.memory_space<vmem>>, vector<1x128xf32>
    %7 = vector.broadcast %6 : vector<1x128xf32> to vector<64x128xf32>
    %8 = arith.addf %5, %7 : vector<64x128xf32>
    %9 = arith.mulf %8, %8 : vector<64x128xf32>
    %cst_6 = arith.constant 5.000000e-01 : f32
    %10 = vector.broadcast %cst_6 : f32 to vector<64x128xf32>
    %11 = arith.mulf %10, %8 : vector<64x128xf32>
    %cst_7 = arith.constant 0.797884583 : f32
    %12 = vector.broadcast %cst_7 : f32 to vector<64x128xf32>
    %13 = arith.mulf %12, %8 : vector<64x128xf32>
    %cst_8 = arith.constant 4.471500e-02 : f32
    %14 = vector.broadcast %cst_8 : f32 to vector<64x128xf32>
    %15 = arith.mulf %14, %9 : vector<64x128xf32>
    %cst_9 = arith.constant 1.000000e+00 : f32
    %16 = vector.broadcast %cst_9 : f32 to vector<64x128xf32>
    %17 = arith.addf %16, %15 : vector<64x128xf32>
    %18 = arith.mulf %13, %17 : vector<64x128xf32>
    %19 = math.tanh %18 : vector<64x128xf32>
    %cst_10 = arith.constant 1.000000e+00 : f32
    %20 = vector.broadcast %cst_10 : f32 to vector<64x128xf32>
    %21 = arith.addf %20, %19 : vector<64x128xf32>
    %22 = arith.mulf %11, %21 : vector<64x128xf32>
    %c0_11 = arith.constant 0 : index
    %c0_12 = arith.constant 0 : index
    %23 = vector.load %arg8[%c0_11, %c0_12] : memref<64x128xf32, #tpu.memory_space<vmem>>, vector<64x128xf32>
    %c0_13 = arith.constant 0 : index
    %c0_14 = arith.constant 0 : index
    %24 = vector.load %arg5[%c0_13, %c0_14] : memref<128x128xf32, #tpu.memory_space<vmem>>, vector<128x128xf32>
    %cst_15 = arith.constant dense<0.000000e+00> : vector<64x128xf32>
    %25 = tpu.matmul %22, %24, %cst_15 {dimension_numbers = #tpu.dot_dimension_numbers<[1], [0], [0], [1], [0, 0, 1, 1], [], []>} : vector<64x128xf32>, vector<128x128xf32>, vector<64x128xf32> -> vector<64x128xf32>
    %26 = arith.addf %23, %25 : vector<64x128xf32>
    %c0_16 = arith.constant 0 : index
    %c0_17 = arith.constant 0 : index
    %27 = vector.load %arg8[%c0_16, %c0_17] : memref<64x128xf32, #tpu.memory_space<vmem>>, vector<64x128xf32>
    tpu.vector_store %arg8[%c0_16, %c0_17], %26 {strides = array<i32>} : memref<64x128xf32, #tpu.memory_space<vmem>>, vector<64x128xf32>,
    %c3_i32 = arith.constant 3 : i32
    %28 = arith.cmpi eq, %arg1, %c3_i32 : i32
    %29 = arith.extui %28 : i1 to i32
    %c0_i32_18 = arith.constant 0 : i32
    %30 = arith.cmpi ne, %29, %c0_i32_18 : i32
    scf.if %30 {
      %c0_19 = arith.constant 0 : index
      %c0_20 = arith.constant 0 : index
      %31 = vector.load %arg8[%c0_19, %c0_20] : memref<64x128xf32, #tpu.memory_space<vmem>>, vector<64x128xf32>
      %c0_21 = arith.constant 0 : index
      %c0_22 = arith.constant 0 : index
      %32 = vector.load %arg6[%c0_21, %c0_22] : memref<1x128xf32, #tpu.memory_space<vmem>>, vector<1x128xf32>
      %33 = vector.broadcast %32 : vector<1x128xf32> to vector<64x128xf32>
      %34 = arith.addf %31, %33 : vector<64x128xf32>
      %c0_23 = arith.constant 0 : index
      %c0_24 = arith.constant 0 : index
      %35 = vector.load %arg7[%c0_23, %c0_24] : memref<64x128xf32, #tpu.memory_space<vmem>>, vector<64x128xf32>
      tpu.vector_store %arg7[%c0_23, %c0_24], %34 {strides = array<i32>} : memref<64x128xf32, #tpu.memory_space<vmem>>, vector<64x128xf32>,
    } else {
    }
    return
  }
  func.func @transform_0(%arg0: i32, %arg1: i32) -> (i32, i32) {
    %c0_i32 = arith.constant 0 : i32
    %c0_i32_0 = arith.constant 0 : i32
    return %arg0, %c0_i32 : i32, i32
  }
  func.func @transform_1(%arg0: i32, %arg1: i32) -> (i32, i32) {
    %c0_i32 = arith.constant 0 : i32
    %c0_i32_0 = arith.constant 0 : i32
    return %c0_i32, %arg1 : i32, i32
  }
  func.func @transform_2(%arg0: i32, %arg1: i32) -> (i32, i32) {
    %c0_i32 = arith.constant 0 : i32
    %c0_i32_0 = arith.constant 0 : i32
    return %c0_i32, %arg1 : i32, i32
  }
  func.func @transform_3(%arg0: i32, %arg1: i32) -> (i32, i32) {
    %c0_i32 = arith.constant 0 : i32
    %c0_i32_0 = arith.constant 0 : i32
    return %arg1, %c0_i32 : i32, i32
  }
  func.func @transform_4(%arg0: i32, %arg1: i32) -> (i32, i32) {
    %c0_i32 = arith.constant 0 : i32
    %c0_i32_0 = arith.constant 0 : i32
    %c0_i32_1 = arith.constant 0 : i32
    return %c0_i32, %c0_i32_0 : i32, i32
  }
  func.func @transform_5(%arg0: i32, %arg1: i32) -> (i32, i32) {
    %c0_i32 = arith.constant 0 : i32
    %c0_i32_0 = arith.constant 0 : i32
    return %arg0, %c0_i32 : i32, i32
  }
}

</mosaic_0001>

<llo_original>
// kernel: mlp_forward.1
$region0: #{mlp_forward.1}
  #allocation0 [shape = 'u32[]', space=smem, size = 0x4, offset = 0x4, fixed_abs, tag = 'smem constant byte address 0x4 - core index']
  #allocation1 [shape = 'u32[144,128]{1,0:T(1,128)}', space=vmem, size = 0x12000, scoped, tag = 'internal scratch']
  #allocation2 [shape = 'f32[64,128]{1,0:T(8,128)}', space=vmem, size = 0x8000, scoped, tag = 'scratch operand']
  %s0 = inlined_call_operand.hbm [shape: f32[128,128], index: 0, kind: input, shape index: {}]
  %s1 = inlined_call_operand.hbm [shape: f32[128,512], index: 1, kind: input, shape index: {}]
  %s2 = inlined_call_operand.vmem [shape: f32[1,512], index: 2, kind: input, shape index: {}]
  %s3 = inlined_call_operand.hbm [shape: f32[512,128], index: 3, kind: input, shape index: {}]
  %s4 = inlined_call_operand.vmem [shape: f32[1,128], index: 4, kind: input, shape index: {}]
  %s5 = inlined_call_operand.hbm [shape: f32[128,128], index: 5, kind: output, shape index: {}]
  %s6 = sld [smem:[#allocation0]]
  $region73: #{mlp_forward.1} parent=0
    _
  %s8 = ssub.s32 1, %s6
  %s9 = scalar_select 0, %s8, %s6
  $region1: #{mlp_forward.1} parent=0
    #allocation3 [shape = 'u8[65536]{0}', space=vmem, size = 0x10000, scoped, tag = 'input window, operand 0']
    #allocation4 [shape = 's32[2]{0}', space=sflag, size = 0x8, scoped, tag = 'scoped memory for mlp_forward.1']
    #allocation5 [shape = 's32[2]{0}', space=sflag, size = 0x8, scoped, tag = 'scoped memory for mlp_forward.1']
    #allocation6 [shape = 'u8[131072]{0}', space=vmem, size = 0x20000, scoped, tag = 'input window, operand 1']
    #allocation7 [shape = 's32[2]{0}', space=sflag, size = 0x8, scoped, tag = 'scoped memory for mlp_forward.1']
    #allocation8 [shape = 'u8[131072]{0}', space=vmem, size = 0x20000, scoped, tag = 'input window, operand 3']
    #allocation9 [shape = 'u8[65536]{0}', space=vmem, size = 0x10000, scoped, tag = 'output window, operand 0']
    %10 = vsyncpa [#allocation4], 0
    %s11 = scalar_lea.sflag [#allocation4], 1
    %12 = vsyncpa %s11, 0
    %13 = vsyncpa [#allocation7], 0
    %s14 = scalar_lea.sflag [#allocation7], 1
    %15 = vsyncpa %s14, 0
    %16 = vsyncpa [#allocation5], 0
    %s17 = scalar_lea.sflag [#allocation5], 1
    %18 = vsyncpa %s17, 0
    loop: start=0, step=1, limit=10
    $region2: #{mlp_forward.1} parent=1 // loop_pre_header
      _
    $region3: #{mlp_forward.1} parent=1 // loop_header
      %s20 = sphi 0, %s24
      %p21 = scmp.ge.s32.totalorder %s20, 10
      %s27 = sphi 0, %s39
      %s28 = sphi 0, %s35
      %s29 = sphi 0, %s27
      %s30 = sphi 0, %s28
      %s31 = sphi 0, %s29
      %s32 = sphi 0, %s30
      %s42 = sphi 0, %s44
      %s45 = sphi 0, %s42
      %s46 = sphi 0, %s45
      %s62 = sphi 0, %s46
      %s68 = sphi 0, %s70
      %s71 = sphi 0, %s68
      %s72 = sphi 0, %s71
      %s88 = sphi 0, %s72
      %s94 = sphi 0, %s96
      %s97 = sphi 0, %s94
      %s98 = sphi 0, %s97
      %s114 = sphi 0, %s98
      %s120 = sphi 0, %s122
      %s123 = sphi 0, %s120
      %s124 = sphi 0, %s123
      %s140 = sphi 0, %s124
      %s144 = sphi 0, %s144
      %s146 = sphi 0, %s144
      %s147 = sphi 0, %s146
      %s161 = sphi 0, %s147
      %s167 = sphi 0, %s169
      %s170 = sphi 0, %s167
      %s171 = sphi 0, %s170
      %s187 = sphi 0, %s171
    $region4: #{mlp_forward.1} parent=1 // loop_header_branch
      %23 = sbr.rel (%p21) target = $region8
    $region5: #{mlp_forward.1} parent=1 // loop_body
      %s25 = ssub.s32 %s20, 1
      %s26 = ssub.s32 %s20, 2
      %s33 = sadd.s32 1, %s28
      %p34 = scmp.ge.s32.totalorder %s33, 4
      %s35 = scalar_select %p34, 0, %s33
      %s36 = sadd.s32 1, %s27
      %s37 = scalar_select %p34, %s36, %s27
      %p38 = scmp.ge.s32.totalorder %s37, 2
      %s39 = scalar_select %p38, 0, %s37
      %s40 = ssub.s32 %s27, %s39
      %p41 = scmp.eq.s32.totalorder %s40, 0
      %s43 = sadd.s32 %s42, 1
      %s44 = scalar_select %p41, %s42, %s43
      %p47 = pneg %p41
      %p48 = scmp.eq.s32.totalorder %s20, 7
      %p49 = por %p47, %p48
      %p50 = scmp.ne.s32.totalorder %s42, %s45
      %p51 = scmp.eq.s32.totalorder %s20, 0
      %p52 = por %p50, %p51
      %p53 = scmp.ne.s32.totalorder %s42, %s45
      %p54 = scmp.eq.s32.totalorder %s25, 7
      %p55 = por %p53, %p54
      %p56 = scmp.ne.s32.totalorder %s45, %s46
      %p57 = scmp.eq.s32.totalorder %s25, 0
      %p58 = por %p56, %p57
      %p59 = scmp.ne.s32.totalorder %s45, %s46
      %p60 = scmp.eq.s32.totalorder %s26, 7
      %p61 = por %p59, %p60
      %p63 = scmp.ne.s32.totalorder %s46, %s62
      %p64 = scmp.eq.s32.totalorder %s26, 0
      %p65 = por %p63, %p64
      %s66 = ssub.s32 %s28, %s35
      %p67 = scmp.eq.s32.totalorder %s66, 0
      %s69 = sadd.s32 %s68, 1
      %s70 = scalar_select %p67, %s68, %s69
      %p73 = pneg %p67
      %p74 = scmp.eq.s32.totalorder %s20, 7
      %p75 = por %p73, %p74
      %p76 = scmp.ne.s32.totalorder %s68, %s71
      %p77 = scmp.eq.s32.totalorder %s20, 0
      %p78 = por %p76, %p77
      %p79 = scmp.ne.s32.totalorder %s68, %s71
      %p80 = scmp.eq.s32.totalorder %s25, 7
      %p81 = por %p79, %p80
      %p82 = scmp.ne.s32.totalorder %s71, %s72
      %p83 = scmp.eq.s32.totalorder %s25, 0
      %p84 = por %p82, %p83
      %p85 = scmp.ne.s32.totalorder %s71, %s72
      %p86 = scmp.eq.s32.totalorder %s26, 7
      %p87 = por %p85, %p86
      %p89 = scmp.ne.s32.totalorder %s72, %s88
      %p90 = scmp.eq.s32.totalorder %s26, 0
      %p91 = por %p89, %p90
      %s92 = ssub.s32 %s28, %s35
      %p93 = scmp.eq.s32.totalorder %s92, 0
      %s95 = sadd.s32 %s94, 1
      %s96 = scalar_select %p93, %s94, %s95
      %p99 = pneg %p93
      %p100 = scmp.eq.s32.totalorder %s20, 7
      %p101 = por %p99, %p100
      %p102 = scmp.ne.s32.totalorder %s94, %s97
      %p103 = scmp.eq.s32.totalorder %s20, 0
      %p104 = por %p102, %p103
      %p105 = scmp.ne.s32.totalorder %s94, %s97
      %p106 = scmp.eq.s32.totalorder %s25, 7
      %p107 = por %p105, %p106
      %p108 = scmp.ne.s32.totalorder %s97, %s98
      %p109 = scmp.eq.s32.totalorder %s25, 0
      %p110 = por %p108, %p109
      %p111 = scmp.ne.s32.totalorder %s97, %s98
      %p112 = scmp.eq.s32.totalorder %s26, 7
      %p113 = por %p111, %p112
      %p115 = scmp.ne.s32.totalorder %s98, %s114
      %p116 = scmp.eq.s32.totalorder %s26, 0
      %p117 = por %p115, %p116
      %s118 = ssub.s32 %s28, %s35
      %p119 = scmp.eq.s32.totalorder %s118, 0
      %s121 = sadd.s32 %s120, 1
      %s122 = scalar_select %p119, %s120, %s121
      %p125 = pneg %p119
      %p126 = scmp.eq.s32.totalorder %s20, 7
      %p127 = por %p125, %p126
      %p128 = scmp.ne.s32.totalorder %s120, %s123
      %p129 = scmp.eq.s32.totalorder %s20, 0
      %p130 = por %p128, %p129
      %p131 = scmp.ne.s32.totalorder %s120, %s123
      %p132 = scmp.eq.s32.totalorder %s25, 7
      %p133 = por %p131, %p132
      %p134 = scmp.ne.s32.totalorder %s123, %s124
      %p135 = scmp.eq.s32.totalorder %s25, 0
      %p136 = por %p134, %p135
      %p137 = scmp.ne.s32.totalorder %s123, %s124
      %p138 = scmp.eq.s32.totalorder %s26, 7
      %p139 = por %p137, %p138
      %p141 = scmp.ne.s32.totalorder %s124, %s140
      %p142 = scmp.eq.s32.totalorder %s26, 0
      %p143 = por %p141, %p142
      %s145 = sadd.s32 %s144, 1
      %p148 = scmp.eq.s32.totalorder %s20, 7
      %p149 = scmp.ne.s32.totalorder %s144, %s146
      %p150 = scmp.eq.s32.totalorder %s20, 0
      %p151 = por %p149, %p150
      %p152 = scmp.ne.s32.totalorder %s144, %s146
      %p153 = scmp.eq.s32.totalorder %s25, 7
      %p154 = por %p152, %p153
      %p155 = scmp.ne.s32.totalorder %s146, %s147
      %p156 = scmp.eq.s32.totalorder %s25, 0
      %p157 = por %p155, %p156
      %p158 = scmp.ne.s32.totalorder %s146, %s147
      %p159 = scmp.eq.s32.totalorder %s26, 7
      %p160 = por %p158, %p159
      %p162 = scmp.ne.s32.totalorder %s147, %s161
      %p163 = scmp.eq.s32.totalorder %s26, 0
      %p164 = por %p162, %p163
      %s165 = ssub.s32 %s27, %s39
      %p166 = scmp.eq.s32.totalorder %s165, 0
      %s168 = sadd.s32 %s167, 1
      %s169 = scalar_select %p166, %s167, %s168
      %p172 = pneg %p166
      %p173 = scmp.eq.s32.totalorder %s20, 7
      %p174 = por %p172, %p173
      %p175 = scmp.ne.s32.totalorder %s167, %s170
      %p176 = scmp.eq.s32.totalorder %s20, 0
      %p177 = por %p175, %p176
      %p178 = scmp.ne.s32.totalorder %s167, %s170
      %p179 = scmp.eq.s32.totalorder %s25, 7
      %p180 = por %p178, %p179
      %p181 = scmp.ne.s32.totalorder %s170, %s171
      %p182 = scmp.eq.s32.totalorder %s25, 0
      %p183 = por %p181, %p182
      %p184 = scmp.ne.s32.totalorder %s170, %s171
      %p185 = scmp.eq.s32.totalorder %s26, 7
      %p186 = por %p184, %p185
      %p188 = scmp.ne.s32.totalorder %s171, %s187
      %p189 = scmp.eq.s32.totalorder %s26, 0
      %p190 = por %p188, %p189
      %p191 = scmp.le.s32.totalorder 1, %s20
      %p192 = scmp.lt.s32.totalorder %s20, 9
      %p193 = pnand %p191, %p192
      %p194 = pneg %p193
      // Predicated region
      $region9: #{mlp_forward.1} parent=5 // pred_check
        _
      $region10: #{mlp_forward.1} parent=5 // pred_check_branch
        %196 = sbr.rel (%p193) target = $region12
      $region11: #{mlp_forward.1} parent=5 // pred_region
        %s197 = ssub.s32 %s20, 1
        // Predicated region
        $region13: #{mlp_forward.1} parent=11 // pred_check
          %p198 = pneg %p157
        $region14: #{mlp_forward.1} parent=11 // pred_check_branch
          %200 = sbr.rel (%p198) target = $region16
        $region15: #{mlp_forward.1} parent=11 // pred_region
          _
        $region16: #{mlp_forward.1} parent=11 // pred_fallthru
          _
      $region12: #{mlp_forward.1} parent=5 // pred_fallthru
        _
      %p201 = scmp.lt.s32.totalorder %s20, 8
      // Predicated region
      $region17: #{mlp_forward.1} parent=5 // pred_check
        %p202 = pneg %p201
      $region18: #{mlp_forward.1} parent=5 // pred_check_branch
        %204 = sbr.rel (%p202) target = $region20
      $region19: #{mlp_forward.1} parent=5 // pred_region
        // Predicated region
        $region21: #{mlp_forward.1} parent=19 // pred_check
          %p205 = pneg %p52
        $region22: #{mlp_forward.1} parent=19 // pred_check_branch
          %207 = sbr.rel (%p205) target = $region24
        $region23: #{mlp_forward.1} parent=19 // pred_region
          %s208 = sand.u32 %s42, 1
          %s209 = scalar_lea.sflag [#allocation4], %s208
          %s210 = sand.u32 %s42, 1
          %s211 = smul.addr %s210, 64
          %s212 = scalar_lea.vmem [#allocation3], %s211
          %s213 = smul.u32 8, %s27
          %s215 = ssub.s32 1024, 1024
          %216 = vsyncadd %s209, %s215
          %s217 = smul.addr %s213, 128
          %s218 = scalar_lea.hbm %s0, %s217
          %s219 = sshll.u32 %s212, 4
          %s220 = int_to_ptr.vmem [resolvable:$true] %s219
          %225 = dma.hbm_to_vmem [thread:$0]  %s218, 1024, %s220, %s209, 128, 128, 8
        $region24: #{mlp_forward.1} parent=19 // pred_fallthru
          _
        // Predicated region
        $region25: #{mlp_forward.1} parent=19 // pred_check
          %p226 = pneg %p78
        $region26: #{mlp_forward.1} parent=19 // pred_check_branch
          %228 = sbr.rel (%p226) target = $region28
        $region27: #{mlp_forward.1} parent=19 // pred_region
          %s229 = sand.u32 %s20, 1
          %s230 = scalar_lea.sflag [#allocation7], %s229
          %s231 = sand.u32 %s68, 1
          %s232 = smul.addr %s231, 128
          %s233 = scalar_lea.vmem [#allocation6], %s232
          %s235 = ssub.s32 2048, 2048
          %236 = vsyncadd %s230, %s235
          %s237 = smul.addr %s28, 128
          %s238 = scalar_lea.hbm %s1, %s237
          %s239 = sshll.u32 %s233, 4
          %s240 = int_to_ptr.vmem [resolvable:$true] %s239
          %245 = dma.hbm_to_vmem [thread:$0]  %s238, 2048, %s240, %s230, 512, 128, 8
        $region28: #{mlp_forward.1} parent=19 // pred_fallthru
          _
        // Predicated region
        $region29: #{mlp_forward.1} parent=19 // pred_check
          %p246 = pneg %p104
        $region30: #{mlp_forward.1} parent=19 // pred_check_branch
          %248 = sbr.rel (%p246) target = $region32
        $region31: #{mlp_forward.1} parent=19 // pred_region
          %p249 = scmp.lt.s32.totalorder %s28, 3
          %s250 = scalar_select %p249, %s28, 3
          %s251 = scalar_lea.vmem %s2, %s250
        $region32: #{mlp_forward.1} parent=19 // pred_fallthru
          _
        // Predicated region
        $region33: #{mlp_forward.1} parent=19 // pred_check
          %p252 = pneg %p130
        $region34: #{mlp_forward.1} parent=19 // pred_check_branch
          %254 = sbr.rel (%p252) target = $region36
        $region35: #{mlp_forward.1} parent=19 // pred_region
          %s255 = sand.u32 %s20, 1
          %s256 = scalar_lea.sflag [#allocation7], %s255
          %s257 = sand.u32 %s120, 1
          %s258 = smul.addr %s257, 128
          %s259 = scalar_lea.vmem [#allocation8], %s258
          %s260 = smul.u32 16, %s28
          %s262 = ssub.s32 2048, 2048
          %263 = vsyncadd %s256, %s262
          %s264 = smul.addr %s260, 128
          %s265 = scalar_lea.hbm %s3, %s264
          %s266 = sshll.u32 %s259, 4
          %s267 = int_to_ptr.vmem [resolvable:$true] %s266
          %272 = dma.hbm_to_vmem [thread:$0]  %s265, 2048, %s267, %s256, 128, 128, 8
        $region36: #{mlp_forward.1} parent=19 // pred_fallthru
          _
      $region20: #{mlp_forward.1} parent=5 // pred_fallthru
        _
      %p273 = scmp.le.s32.totalorder 1, %s20
      %p274 = scmp.lt.s32.totalorder %s20, 9
      %p275 = pnand %p273, %p274
      %p276 = pneg %p275
      // Predicated region
      $region37: #{mlp_forward.1} parent=5 // pred_check
        _
      $region38: #{mlp_forward.1} parent=5 // pred_check_branch
        %278 = sbr.rel (%p275) target = $region40
      $region39: #{mlp_forward.1} parent=5 // pred_region
        %s279 = ssub.s32 %s20, 1
        %s280 = sand.u32 %s45, 1
        %s281 = scalar_lea.sflag [#allocation4], %s280
        %s282 = sand.u32 %s45, 1
        %s283 = smul.addr %s282, 64
        %s284 = scalar_lea.vmem [#allocation3], %s283
        // Predicated region
        $region41: #{mlp_forward.1} parent=39 // pred_check
          %p285 = pneg %p58
        $region42: #{mlp_forward.1} parent=39 // pred_check_branch
          %287 = sbr.rel (%p285) target = $region44
        $region43: #{mlp_forward.1} parent=39 // pred_region
          %288 = dma.done %s281, 1024
        $region44: #{mlp_forward.1} parent=39 // pred_fallthru
          _
        %s289 = sand.u32 %s25, 1
        %s290 = scalar_lea.sflag [#allocation7], %s289
        %s291 = sand.u32 %s71, 1
        %s292 = smul.addr %s291, 128
        %s293 = scalar_lea.vmem [#allocation6], %s292
        // Predicated region
        $region45: #{mlp_forward.1} parent=39 // pred_check
          %p294 = pneg %p84
        $region46: #{mlp_forward.1} parent=39 // pred_check_branch
          %296 = sbr.rel (%p294) target = $region48
        $region47: #{mlp_forward.1} parent=39 // pred_region
          %297 = dma.done %s290, 2048
        $region48: #{mlp_forward.1} parent=39 // pred_fallthru
          _
        %s298 = sand.u32 %s25, 1
        %s299 = scalar_lea.sflag [#allocation7], %s298
        %s300 = sand.u32 %s123, 1
        %s301 = smul.addr %s300, 128
        %s302 = scalar_lea.vmem [#allocation8], %s301
        // Predicated region
        $region49: #{mlp_forward.1} parent=39 // pred_check
          %p303 = pneg %p136
        $region50: #{mlp_forward.1} parent=39 // pred_check_branch
          %305 = sbr.rel (%p303) target = $region52
        $region51: #{mlp_forward.1} parent=39 // pred_region
          %306 = dma.done %s299, 2048
        $region52: #{mlp_forward.1} parent=39 // pred_fallthru
          _
        %s307 = sand.u32 %s45, 1
        %s308 = scalar_lea.sflag [#allocation4], %s307
        %s309 = sand.u32 %s45, 1
        %s310 = smul.addr %s309, 64
        %s311 = scalar_lea.vmem [#allocation3], %s310
        %p312 = pneg %p58
        %p313 = pneg %p55
        %s314 = sand.u32 %s25, 1
        %s315 = scalar_lea.sflag [#allocation7], %s314
        %s316 = sand.u32 %s71, 1
        %s317 = smul.addr %s316, 128
        %s318 = scalar_lea.vmem [#allocation6], %s317
        %p319 = pneg %p84
        %p320 = pneg %p81
        %p321 = scmp.lt.s32.totalorder %s30, 3
        %s322 = scalar_select %p321, %s30, 3
        %s323 = scalar_lea.vmem %s2, %s322
        %p324 = pneg %p110
        %p325 = pneg %p107
        %s326 = sand.u32 %s25, 1
        %s327 = scalar_lea.sflag [#allocation7], %s326
        %s328 = sand.u32 %s123, 1
        %s329 = smul.addr %s328, 128
        %s330 = scalar_lea.vmem [#allocation8], %s329
        %p331 = pneg %p136
        %p332 = pneg %p133
        %p333 = pneg %p157
        %p334 = pneg %p154
        %p335 = pneg %p183
        %p336 = pneg %p180
        %s337 = sand.u32 %s170, 1
        %s338 = scalar_lea.sflag [#allocation5], %s337
        %s339 = sand.u32 %s170, 1
        %s340 = smul.addr %s339, 64
        %s341 = scalar_lea.vmem [#allocation9], %s340
        %s342 = smul.u32 8, %s29
        %p343 = scmp.lt.s32.totalorder %s30, 3
        %s344 = scalar_select %p343, %s30, 3
        %s345 = scalar_lea.vmem %s2, %s344
        %s346 = smul.u32 16, %s30
        %s347 = smul.u32 8, %s29
        %p348 = scmp.eq.s32.totalorder %s30, 0
        // Predicated region
        $region53: #{mlp_forward.1} parent=39 // pred_check
          %p349 = pneg %p348
        $region54: #{mlp_forward.1} parent=39 // pred_check_branch
          %351 = sbr.rel (%p349) target = $region56
        $region55: #{mlp_forward.1} parent=39 // pred_region
          %352 = vst [vmem:[#allocation2] sm:$0xff] 0.0
          %353 = vst [vmem:[#allocation2 + $0x8] sm:$0xff] 0.0
          %354 = vst [vmem:[#allocation2 + $0x10] sm:$0xff] 0.0
          %355 = vst [vmem:[#allocation2 + $0x18] sm:$0xff] 0.0
          %356 = vst [vmem:[#allocation2 + $0x20] sm:$0xff] 0.0
          %357 = vst [vmem:[#allocation2 + $0x28] sm:$0xff] 0.0
          %358 = vst [vmem:[#allocation2 + $0x30] sm:$0xff] 0.0
          %359 = vst [vmem:[#allocation2 + $0x38] sm:$0xff] 0.0
        $region56: #{mlp_forward.1} parent=39 // pred_fallthru
          _
        %v360 = vld [vmem:[%s284] sm:$0xff]
        %v361 = vld [vmem:[%s284 + $0x8] sm:$0xff]
        %v362 = vld [vmem:[%s284 + $0x10] sm:$0xff]
        %v363 = vld [vmem:[%s284 + $0x18] sm:$0xff]
        %v364 = vld [vmem:[%s284 + $0x20] sm:$0xff]
        %v365 = vld [vmem:[%s284 + $0x28] sm:$0xff]
        %v366 = vld [vmem:[%s284 + $0x30] sm:$0xff]
        %v367 = vld [vmem:[%s284 + $0x38] sm:$0xff]
        %v368 = vld [vmem:[%s293] sm:$0xff]
        %v369 = vld [vmem:[%s293 + $0x8] sm:$0xff]
        %v370 = vld [vmem:[%s293 + $0x10] sm:$0xff]
        %v371 = vld [vmem:[%s293 + $0x18] sm:$0xff]
        %v372 = vld [vmem:[%s293 + $0x20] sm:$0xff]
        %v373 = vld [vmem:[%s293 + $0x28] sm:$0xff]
        %v374 = vld [vmem:[%s293 + $0x30] sm:$0xff]
        %v375 = vld [vmem:[%s293 + $0x38] sm:$0xff]
        %v376 = vld [vmem:[%s293 + $0x40] sm:$0xff]
        %v377 = vld [vmem:[%s293 + $0x48] sm:$0xff]
        %v378 = vld [vmem:[%s293 + $0x50] sm:$0xff]
        %v379 = vld [vmem:[%s293 + $0x58] sm:$0xff]
        %v380 = vld [vmem:[%s293 + $0x60] sm:$0xff]
        %v381 = vld [vmem:[%s293 + $0x68] sm:$0xff]
        %v382 = vld [vmem:[%s293 + $0x70] sm:$0xff]
        %v383 = vld [vmem:[%s293 + $0x78] sm:$0xff]
        %v384 = vld [vmem:[%s345] sm:$0x1]
        %v386 = vlaneseq
        %v387 = vshrl.u32 %v386, 7
        %v388 = vsub.s32 0, %v387
        %v389 = vrot.slane %v384, %v388
        %391 = vmatprep.subr.mxu0 0.0
        %392 = vmatpush1.msra.mxu0 %v368
        %393 = vmatprep.subr.mxu0 0.0
        %394 = vmatpush1.msra.mxu0 %v369
        %395 = vmatprep.subr.mxu0 0.0
        %396 = vmatpush1.msra.mxu0 %v370
        %397 = vmatprep.subr.mxu0 0.0
        %398 = vmatpush1.msra.mxu0 %v371
        %399 = vmatprep.subr.mxu0 0.0
        %400 = vmatpush1.msra.mxu0 %v372
        %401 = vmatprep.subr.mxu0 0.0
        %402 = vmatpush1.msra.mxu0 %v373
        %403 = vmatprep.subr.mxu0 0.0
        %404 = vmatpush1.msra.mxu0 %v374
        %405 = vmatprep.subr.mxu0 0.0
        %406 = vmatpush1.msra.mxu0 %v375
        %407 = vmatprep.subr.mxu0 0.0
        %408 = vmatpush1.msra.mxu0 %v376
        %409 = vmatprep.subr.mxu0 0.0
        %410 = vmatpush1.msra.mxu0 %v377
        %411 = vmatprep.subr.mxu0 0.0
        %412 = vmatpush1.msra.mxu0 %v378
        %413 = vmatprep.subr.mxu0 0.0
        %414 = vmatpush1.msra.mxu0 %v379
        %415 = vmatprep.subr.mxu0 0.0
        %416 = vmatpush1.msra.mxu0 %v380
        %417 = vmatprep.subr.mxu0 0.0
        %418 = vmatpush1.msra.mxu0 %v381
        %419 = vmatprep.subr.mxu0 0.0
        %420 = vmatpush1.msra.mxu0 %v382
        %421 = vmatprep.subr.mxu0 0.0
        %422 = vmatpush1.msra.mxu0 %v383
        %423 = vmatprep.subr.mxu0 0.0
        %424 = vmatpush1.msra.mxu0 0.0
        %425 = vmatprep.subr.mxu0 0.0
        %426 = vmatpush1.msra.mxu0 0.0
        %427 = vmatprep.subr.mxu0 0.0
        %428 = vmatpush1.msra.mxu0 0.0
        %429 = vmatprep.subr.mxu0 0.0
        %430 = vmatpush1.msra.mxu0 0.0
        %431 = vmatprep.subr.mxu0 0.0
        %432 = vmatpush1.msra.mxu0 0.0
        %433 = vmatprep.subr.mxu0 0.0
        %434 = vmatpush1.msra.mxu0 0.0
        %435 = vmatprep.subr.mxu0 0.0
        %436 = vmatpush1.msra.mxu0 0.0
        %437 = vmatprep.subr.mxu0 0.0
        %438 = vmatpush1.msra.mxu0 0.0
        %439 = vmatprep.subr.mxu0 0.0
        %440 = vmatpush1.msra.mxu0 0.0
        %441 = vmatprep.subr.mxu0 0.0
        %442 = vmatpush1.msra.mxu0 0.0
        %443 = vmatprep.subr.mxu0 0.0
        %444 = vmatpush1.msra.mxu0 0.0
        %445 = vmatprep.subr.mxu0 0.0
        %446 = vmatpush1.msra.mxu0 0.0
        %447 = vmatprep.subr.mxu0 0.0
        %448 = vmatpush1.msra.mxu0 0.0
        %449 = vmatprep.subr.mxu0 0.0
        %450 = vmatpush1.msra.mxu0 0.0
        %451 = vmatprep.subr.mxu0 0.0
        %452 = vmatpush1.msra.mxu0 0.0
        %453 = vmatprep.subr.mxu0 0.0
        %454 = vmatpush1.msra.mxu0 0.0
        %455 = vmatprep.mubr.f32.mxu0 0.0
        %456 = vmatmul.mubr.f32.gmra.mrb[0].mxu0 %v360
        %v457 = vpop.f32.mrb[0].mxu0
        %v458 = vadd.f32 %v389, %v457
        %v459 = vpop.f32.mrb[0].mxu0
        %460 = vmatprep.mubr.f32.mxu0 0.0
        %461 = vmatmul.mubr.f32.gmra.mrb[0].mxu0 %v361
        %v462 = vpop.f32.mrb[0].mxu0
        %v463 = vadd.f32 %v389, %v462
        %v464 = vpop.f32.mrb[0].mxu0
        %465 = vmatprep.mubr.f32.mxu0 0.0
        %466 = vmatmul.mubr.f32.gmra.mrb[0].mxu0 %v362
        %v467 = vpop.f32.mrb[0].mxu0
        %v468 = vadd.f32 %v389, %v467
        %v469 = vpop.f32.mrb[0].mxu0
        %470 = vmatprep.mubr.f32.mxu0 0.0
        %471 = vmatmul.mubr.f32.gmra.mrb[0].mxu0 %v363
        %v472 = vpop.f32.mrb[0].mxu0
        %v473 = vadd.f32 %v389, %v472
        %v474 = vpop.f32.mrb[0].mxu0
        %475 = vmatprep.mubr.f32.mxu0 0.0
        %476 = vmatmul.mubr.f32.gmra.mrb[0].mxu0 %v364
        %v477 = vpop.f32.mrb[0].mxu0
        %v478 = vadd.f32 %v389, %v477
        %v479 = vpop.f32.mrb[0].mxu0
        %480 = vmatprep.mubr.f32.mxu0 0.0
        %481 = vmatmul.mubr.f32.gmra.mrb[0].mxu0 %v365
        %v482 = vpop.f32.mrb[0].mxu0
        %v483 = vadd.f32 %v389, %v482
        %v484 = vpop.f32.mrb[0].mxu0
        %485 = vmatprep.mubr.f32.mxu0 0.0
        %486 = vmatmul.mubr.f32.gmra.mrb[0].mxu0 %v366
        %v487 = vpop.f32.mrb[0].mxu0
        %v488 = vadd.f32 %v389, %v487
        %v489 = vpop.f32.mrb[0].mxu0
        %490 = vmatprep.mubr.f32.mxu0 0.0
        %491 = vmatmul.mubr.f32.gmra.mrb[0].mxu0 %v367
        %v492 = vpop.f32.mrb[0].mxu0
        %v493 = vadd.f32 %v389, %v492
        %v494 = vpop.f32.mrb[0].mxu0
        %495 = vdwg.mxu0
        %v496 = vmul.f32 %v458, %v458
        %v497 = vmul.f32 %v463, %v463
        %v498 = vmul.f32 %v468, %v468
        %v499 = vmul.f32 %v473, %v473
        %v500 = vmul.f32 %v478, %v478
        %v501 = vmul.f32 %v483, %v483
        %v502 = vmul.f32 %v488, %v488
        %v503 = vmul.f32 %v493, %v493
        %v504 = vmul.f32 %v458, 0.5
        %v505 = vmul.f32 %v463, 0.5
        %v506 = vmul.f32 %v468, 0.5
        %v507 = vmul.f32 %v473, 0.5
        %v508 = vmul.f32 %v478, 0.5
        %v509 = vmul.f32 %v483, 0.5
        %v510 = vmul.f32 %v488, 0.5
        %v511 = vmul.f32 %v493, 0.5
        %v512 = vmul.f32 %v458, 0.7978846
        %v513 = vmul.f32 %v463, 0.7978846
        %v514 = vmul.f32 %v468, 0.7978846
        %v515 = vmul.f32 %v473, 0.7978846
        %v516 = vmul.f32 %v478, 0.7978846
        %v517 = vmul.f32 %v483, 0.7978846
        %v518 = vmul.f32 %v488, 0.7978846
        %v519 = vmul.f32 %v493, 0.7978846
        %v520 = vmul.f32 %v496, 0.044715
        %v521 = vmul.f32 %v497, 0.044715
        %v522 = vmul.f32 %v498, 0.044715
        %v523 = vmul.f32 %v499, 0.044715
        %v524 = vmul.f32 %v500, 0.044715
        %v525 = vmul.f32 %v501, 0.044715
        %v526 = vmul.f32 %v502, 0.044715
        %v527 = vmul.f32 %v503, 0.044715
        %v528 = vadd.f32 %v520, 1.0
        %v529 = vadd.f32 %v521, 1.0
        %v530 = vadd.f32 %v522, 1.0
        %v531 = vadd.f32 %v523, 1.0
        %v532 = vadd.f32 %v524, 1.0
        %v533 = vadd.f32 %v525, 1.0
        %v534 = vadd.f32 %v526, 1.0
        %v535 = vadd.f32 %v527, 1.0
        %v536 = vmul.f32 %v512, %v528
        %v537 = vmul.f32 %v513, %v529
        %v538 = vmul.f32 %v514, %v530
        %v539 = vmul.f32 %v515, %v531
        %v540 = vmul.f32 %v516, %v532
        %v541 = vmul.f32 %v517, %v533
        %v542 = vmul.f32 %v518, %v534
        %v543 = vmul.f32 %v519, %v535
        %v544 = vtanh.pop %v536
        %v545 = vtanh.pop %v537
        %v546 = vtanh.pop %v538
        %v547 = vtanh.pop %v539
        %v548 = vtanh.pop %v540
        %v549 = vtanh.pop %v541
        %v550 = vtanh.pop %v542
        %v551 = vtanh.pop %v543
        %v552 = vadd.f32 %v544, 1.0
        %v553 = vadd.f32 %v545, 1.0
        %v554 = vadd.f32 %v546, 1.0
        %v555 = vadd.f32 %v547, 1.0
        %v556 = vadd.f32 %v548, 1.0
        %v557 = vadd.f32 %v549, 1.0
        %v558 = vadd.f32 %v550, 1.0
        %v559 = vadd.f32 %v551, 1.0
        %v560 = vmul.f32 %v504, %v552
        %v561 = vmul.f32 %v505, %v553
        %v562 = vmul.f32 %v506, %v554
        %v563 = vmul.f32 %v507, %v555
        %v564 = vmul.f32 %v508, %v556
        %v565 = vmul.f32 %v509, %v557
        %v566 = vmul.f32 %v510, %v558
        %v567 = vmul.f32 %v511, %v559
        %v568 = vld [vmem:[#allocation2] sm:$0xff]
        %v569 = vld [vmem:[#allocation2 + $0x8] sm:$0xff]
        %v570 = vld [vmem:[#allocation2 + $0x10] sm:$0xff]
        %v571 = vld [vmem:[#allocation2 + $0x18] sm:$0xff]
        %v572 = vld [vmem:[#allocation2 + $0x20] sm:$0xff]
        %v573 = vld [vmem:[#allocation2 + $0x28] sm:$0xff]
        %v574 = vld [vmem:[#allocation2 + $0x30] sm:$0xff]
        %v575 = vld [vmem:[#allocation2 + $0x38] sm:$0xff]
        %v576 = vld [vmem:[%s302] sm:$0xff]
        %v577 = vld [vmem:[%s302 + $0x8] sm:$0xff]
        %v578 = vld [vmem:[%s302 + $0x10] sm:$0xff]
        %v579 = vld [vmem:[%s302 + $0x18] sm:$0xff]
        %v580 = vld [vmem:[%s302 + $0x20] sm:$0xff]
        %v581 = vld [vmem:[%s302 + $0x28] sm:$0xff]
        %v582 = vld [vmem:[%s302 + $0x30] sm:$0xff]
        %v583 = vld [vmem:[%s302 + $0x38] sm:$0xff]
        %v584 = vld [vmem:[%s302 + $0x40] sm:$0xff]
        %v585 = vld [vmem:[%s302 + $0x48] sm:$0xff]
        %v586 = vld [vmem:[%s302 + $0x50] sm:$0xff]
        %v587 = vld [vmem:[%s302 + $0x58] sm:$0xff]
        %v588 = vld [vmem:[%s302 + $0x60] sm:$0xff]
        %v589 = vld [vmem:[%s302 + $0x68] sm:$0xff]
        %v590 = vld [vmem:[%s302 + $0x70] sm:$0xff]
        %v591 = vld [vmem:[%s302 + $0x78] sm:$0xff]
        %592 = vmatprep.subr.mxu0 0.0
        %593 = vmatpush1.msra.mxu0 %v576
        %594 = vmatprep.subr.mxu0 0.0
        %595 = vmatpush1.msra.mxu0 %v577
        %596 = vmatprep.subr.mxu0 0.0
        %597 = vmatpush1.msra.mxu0 %v578
        %598 = vmatprep.subr.mxu0 0.0
        %599 = vmatpush1.msra.mxu0 %v579
        %600 = vmatprep.subr.mxu0 0.0
        %601 = vmatpush1.msra.mxu0 %v580
        %602 = vmatprep.subr.mxu0 0.0
        %603 = vmatpush1.msra.mxu0 %v581
        %604 = vmatprep.subr.mxu0 0.0
        %605 = vmatpush1.msra.mxu0 %v582
        %606 = vmatprep.subr.mxu0 0.0
        %607 = vmatpush1.msra.mxu0 %v583
        %608 = vmatprep.subr.mxu0 0.0
        %609 = vmatpush1.msra.mxu0 %v584
        %610 = vmatprep.subr.mxu0 0.0
        %611 = vmatpush1.msra.mxu0 %v585
        %612 = vmatprep.subr.mxu0 0.0
        %613 = vmatpush1.msra.mxu0 %v586
        %614 = vmatprep.subr.mxu0 0.0
        %615 = vmatpush1.msra.mxu0 %v587
        %616 = vmatprep.subr.mxu0 0.0
        %617 = vmatpush1.msra.mxu0 %v588
        %618 = vmatprep.subr.mxu0 0.0
        %619 = vmatpush1.msra.mxu0 %v589
        %620 = vmatprep.subr.mxu0 0.0
        %621 = vmatpush1.msra.mxu0 %v590
        %622 = vmatprep.subr.mxu0 0.0
        %623 = vmatpush1.msra.mxu0 %v591
        %624 = vmatprep.subr.mxu0 0.0
        %625 = vmatpush1.msra.mxu0 0.0
        %626 = vmatprep.subr.mxu0 0.0
        %627 = vmatpush1.msra.mxu0 0.0
        %628 = vmatprep.subr.mxu0 0.0
        %629 = vmatpush1.msra.mxu0 0.0
        %630 = vmatprep.subr.mxu0 0.0
        %631 = vmatpush1.msra.mxu0 0.0
        %632 = vmatprep.subr.mxu0 0.0
        %633 = vmatpush1.msra.mxu0 0.0
        %634 = vmatprep.subr.mxu0 0.0
        %635 = vmatpush1.msra.mxu0 0.0
        %636 = vmatprep.subr.mxu0 0.0
        %637 = vmatpush1.msra.mxu0 0.0
        %638 = vmatprep.subr.mxu0 0.0
        %639 = vmatpush1.msra.mxu0 0.0
        %640 = vmatprep.subr.mxu0 0.0
        %641 = vmatpush1.msra.mxu0 0.0
        %642 = vmatprep.subr.mxu0 0.0
        %643 = vmatpush1.msra.mxu0 0.0
        %644 = vmatprep.subr.mxu0 0.0
        %645 = vmatpush1.msra.mxu0 0.0
        %646 = vmatprep.subr.mxu0 0.0
        %647 = vmatpush1.msra.mxu0 0.0
        %648 = vmatprep.subr.mxu0 0.0
        %649 = vmatpush1.msra.mxu0 0.0
        %650 = vmatprep.subr.mxu0 0.0
        %651 = vmatpush1.msra.mxu0 0.0
        %652 = vmatprep.subr.mxu0 0.0
        %653 = vmatpush1.msra.mxu0 0.0
        %654 = vmatprep.subr.mxu0 0.0
        %655 = vmatpush1.msra.mxu0 0.0
        %656 = vmatprep.mubr.f32.mxu0 0.0
        %657 = vmatmul.mubr.f32.gmra.mrb[0].mxu0 %v560
        %v658 = vpop.f32.mrb[0].mxu0
        %v659 = vadd.f32 0.0, %v658
        %v660 = vpop.f32.mrb[0].mxu0
        %661 = vmatprep.mubr.f32.mxu0 0.0
        %662 = vmatmul.mubr.f32.gmra.mrb[0].mxu0 %v561
        %v663 = vpop.f32.mrb[0].mxu0
        %v664 = vadd.f32 0.0, %v663
        %v665 = vpop.f32.mrb[0].mxu0
        %666 = vmatprep.mubr.f32.mxu0 0.0
        %667 = vmatmul.mubr.f32.gmra.mrb[0].mxu0 %v562
        %v668 = vpop.f32.mrb[0].mxu0
        %v669 = vadd.f32 0.0, %v668
        %v670 = vpop.f32.mrb[0].mxu0
        %671 = vmatprep.mubr.f32.mxu0 0.0
        %672 = vmatmul.mubr.f32.gmra.mrb[0].mxu0 %v563
        %v673 = vpop.f32.mrb[0].mxu0
        %v674 = vadd.f32 0.0, %v673
        %v675 = vpop.f32.mrb[0].mxu0
        %676 = vmatprep.mubr.f32.mxu0 0.0
        %677 = vmatmul.mubr.f32.gmra.mrb[0].mxu0 %v564
        %v678 = vpop.f32.mrb[0].mxu0
        %v679 = vadd.f32 0.0, %v678
        %v680 = vpop.f32.mrb[0].mxu0
        %681 = vmatprep.mubr.f32.mxu0 0.0
        %682 = vmatmul.mubr.f32.gmra.mrb[0].mxu0 %v565
        %v683 = vpop.f32.mrb[0].mxu0
        %v684 = vadd.f32 0.0, %v683
        %v685 = vpop.f32.mrb[0].mxu0
        %686 = vmatprep.mubr.f32.mxu0 0.0
        %687 = vmatmul.mubr.f32.gmra.mrb[0].mxu0 %v566
        %v688 = vpop.f32.mrb[0].mxu0
        %v689 = vadd.f32 0.0, %v688
        %v690 = vpop.f32.mrb[0].mxu0
        %691 = vmatprep.mubr.f32.mxu0 0.0
        %692 = vmatmul.mubr.f32.gmra.mrb[0].mxu0 %v567
        %v693 = vpop.f32.mrb[0].mxu0
        %v694 = vadd.f32 0.0, %v693
        %v695 = vpop.f32.mrb[0].mxu0
        %696 = vdwg.mxu0
        %v697 = vadd.f32 %v568, %v659
        %v698 = vadd.f32 %v569, %v664
        %v699 = vadd.f32 %v570, %v669
        %v700 = vadd.f32 %v571, %v674
        %v701 = vadd.f32 %v572, %v679
        %v702 = vadd.f32 %v573, %v684
        %v703 = vadd.f32 %v574, %v689
        %v704 = vadd.f32 %v575, %v694
        %705 = vst [vmem:[#allocation2] sm:$0xff] %v697
        %706 = vst [vmem:[#allocation2 + $0x8] sm:$0xff] %v698
        %707 = vst [vmem:[#allocation2 + $0x10] sm:$0xff] %v699
        %708 = vst [vmem:[#allocation2 + $0x18] sm:$0xff] %v700
        %709 = vst [vmem:[#allocation2 + $0x20] sm:$0xff] %v701
        %710 = vst [vmem:[#allocation2 + $0x28] sm:$0xff] %v702
        %711 = vst [vmem:[#allocation2 + $0x30] sm:$0xff] %v703
        %712 = vst [vmem:[#allocation2 + $0x38] sm:$0xff] %v704
        %p713 = scmp.eq.s32.totalorder %s30, 3
        // Predicated region
        $region57: #{mlp_forward.1} parent=39 // pred_check
          %p714 = pneg %p713
        $region58: #{mlp_forward.1} parent=39 // pred_check_branch
          %716 = sbr.rel (%p714) target = $region60
        $region59: #{mlp_forward.1} parent=39 // pred_region
          %v717 = vld [vmem:[#allocation2] sm:$0xff]
          %v718 = vld [vmem:[#allocation2 + $0x8] sm:$0xff]
          %v719 = vld [vmem:[#allocation2 + $0x10] sm:$0xff]
          %v720 = vld [vmem:[#allocation2 + $0x18] sm:$0xff]
          %v721 = vld [vmem:[#allocation2 + $0x20] sm:$0xff]
          %v722 = vld [vmem:[#allocation2 + $0x28] sm:$0xff]
          %v723 = vld [vmem:[#allocation2 + $0x30] sm:$0xff]
          %v724 = vld [vmem:[#allocation2 + $0x38] sm:$0xff]
          %v725 = vld [vmem:[%s4] sm:$0x1]
          %v727 = vlaneseq
          %v728 = vshrl.u32 %v727, 7
          %v729 = vsub.s32 0, %v728
          %v730 = vrot.slane %v725, %v729
          %v732 = vadd.f32 %v717, %v730
          %v733 = vadd.f32 %v718, %v730
          %v734 = vadd.f32 %v719, %v730
          %v735 = vadd.f32 %v720, %v730
          %v736 = vadd.f32 %v721, %v730
          %v737 = vadd.f32 %v722, %v730
          %v738 = vadd.f32 %v723, %v730
          %v739 = vadd.f32 %v724, %v730
          %740 = vst [vmem:[%s341] sm:$0xff] %v732
          %741 = vst [vmem:[%s341 + $0x8] sm:$0xff] %v733
          %742 = vst [vmem:[%s341 + $0x10] sm:$0xff] %v734
          %743 = vst [vmem:[%s341 + $0x18] sm:$0xff] %v735
          %744 = vst [vmem:[%s341 + $0x20] sm:$0xff] %v736
          %745 = vst [vmem:[%s341 + $0x28] sm:$0xff] %v737
          %746 = vst [vmem:[%s341 + $0x30] sm:$0xff] %v738
          %747 = vst [vmem:[%s341 + $0x38] sm:$0xff] %v739
        $region60: #{mlp_forward.1} parent=39 // pred_fallthru
          _
        %s748 = sand.u32 %s170, 1
        %s749 = scalar_lea.sflag [#allocation5], %s748
        %s750 = sand.u32 %s170, 1
        %s751 = smul.addr %s750, 64
        %s752 = scalar_lea.vmem [#allocation9], %s751
        // Predicated region
        $region61: #{mlp_forward.1} parent=39 // pred_check
          %p753 = pneg %p180
        $region62: #{mlp_forward.1} parent=39 // pred_check_branch
          %755 = sbr.rel (%p753) target = $region64
        $region63: #{mlp_forward.1} parent=39 // pred_region
          %s756 = smul.u32 8, %s29
          %s758 = ssub.s32 1024, 1024
          %759 = vsyncadd %s749, %s758
          %s760 = smul.addr %s756, 128
          %s761 = scalar_lea.hbm %s5, %s760
          %s762 = sshll.u32 %s752, 4
          %s763 = int_to_ptr.vmem [resolvable:$true] %s762
          %768 = dma.vmem_to_hbm [thread:$0]  %s763, 1024, %s761, %s749, 128, 128, 8
        $region64: #{mlp_forward.1} parent=39 // pred_fallthru
          _
      $region40: #{mlp_forward.1} parent=5 // pred_fallthru
        _
      %p769 = scmp.le.s32.totalorder 2, %s20
      // Predicated region
      $region65: #{mlp_forward.1} parent=5 // pred_check
        %p770 = pneg %p769
      $region66: #{mlp_forward.1} parent=5 // pred_check_branch
        %772 = sbr.rel (%p770) target = $region68
      $region67: #{mlp_forward.1} parent=5 // pred_region
        %s773 = ssub.s32 %s20, 2
        // Predicated region
        $region69: #{mlp_forward.1} parent=67 // pred_check
          %p774 = pneg %p186
        $region70: #{mlp_forward.1} parent=67 // pred_check_branch
          %776 = sbr.rel (%p774) target = $region72
        $region71: #{mlp_forward.1} parent=67 // pred_region
          %s777 = sand.u32 %s171, 1
          %s778 = scalar_lea.sflag [#allocation5], %s777
          %s779 = sand.u32 %s171, 1
          %s780 = smul.addr %s779, 64
          %s781 = scalar_lea.vmem [#allocation9], %s780
          %782 = dma.done %s778, 1024
        $region72: #{mlp_forward.1} parent=67 // pred_fallthru
          _
      $region68: #{mlp_forward.1} parent=5 // pred_fallthru
        _
    $region6: #{mlp_forward.1} parent=1 // loop_footer
      %s24 = sadd.s32 1, %s20
    $region7: #{mlp_forward.1} parent=1 // loop_footer_branch
      %19 = sbr.rel target = $region3
    $region8: #{mlp_forward.1} parent=1 // loop_exit
      _
    %783 = vsyncpa [#allocation4], 1
    %s784 = scalar_lea.sflag [#allocation4], 1
    %785 = vsyncpa %s784, 1
    %786 = vsyncpa [#allocation7], 1
    %s787 = scalar_lea.sflag [#allocation7], 1
    %788 = vsyncpa %s787, 1
    %789 = vsyncpa [#allocation5], 1
    %s790 = scalar_lea.sflag [#allocation5], 1
    %791 = vsyncpa %s790, 1

</llo_original>
